<compile_context>
chip_gen: v6e
topology: v6e:2x2x1
jax: 0.10.0
libtpu: 0.0.40
codegen_flags: <defaults>
</compile_context>

<pallas_src>
import functools
import math

import jax
import jax.numpy as jnp
from jax import lax
from jax.experimental import pallas as pl
from jax.experimental.pallas import tpu as pltpu

_LANE = 128

# (tm_target, tk_target) — roofline-driven row-tile / K-tile sizes.
_TILE_TARGETS = {
    "v6e": (768, 512),    # ridge ~650-700 flop/B, 128 MiB VMEM -> big tm
    "v7x": (512, 256),    # ridge ~310 flop/B, only 64 MiB VMEM -> smaller tk
    "v5e": (256, 1024),   # ridge ~240 flop/B; big tk cuts k-step/RMW overhead
    "unknown": (512, 512),
}


def _round_up(x, m):
    return ((x + m - 1) // m) * m


def _gelu_exact(x):
    # PyTorch nn.GELU() default is the exact (erf-based) GELU.
    return 0.5 * x * (1.0 + lax.erf(x * (1.0 / math.sqrt(2.0))))


def _tpu_generation():
    try:
        kind = jax.devices()[0].device_kind.lower()
    except Exception:
        return "unknown"
    if "v7" in kind:
        return "v7x"
    if "v6" in kind:
        return "v6e"
    if "v5" in kind and ("lite" in kind or "5e" in kind):
        return "v5e"
    return "unknown"


def _vmem_capacity_bytes(gen):
    try:
        cap = int(pltpu.get_tpu_info().vmem_capacity_bytes)
        if cap > 0:
            return cap
    except Exception:
        pass
    if gen in ("v6e", "v5e"):
        return 128 << 20
    return 64 << 20   # conservative default (v7x / unknown)


def _valid_tks(inner_p):
    """Multiples of 128 that exactly divide inner_p (descending)."""
    n = inner_p // _LANE
    return sorted({d * _LANE for d in range(1, n + 1) if n % d == 0},
                  reverse=True)


def _vmem_estimate(tm, tk, dim_p, in_bytes, w_bytes, out_bytes):
    sub = 256 if tk % 256 == 0 else 128
    est = 2 * tm * dim_p * in_bytes        # x row tile (double buffered)
    est += 2 * dim_p * tk * w_bytes        # W1 K-tile
    est += 2 * tk * dim_p * w_bytes        # W2 K-tile
    est += 2 * 8 * tk * w_bytes            # b1 (sublane padded)
    est += 2 * 8 * dim_p * w_bytes         # b2
    est += 2 * tm * dim_p * out_bytes      # output tile
    est += tm * dim_p * 4                  # f32 accumulator scratch
    est += tm * dim_p * 4                  # matmul-2 result temporary
    est += 2 * tm * sub * 4                # GELU / h sub-chunk temporaries
    return est


def _ffn_kernel(x_ref, w1_ref, b1_ref, w2_ref, b2_ref, o_ref, *scratch,
                sub, n_sub, single_step):
    # x_ref:  (tm, dim_p)      row tile, resident across the k axis
    # w1_ref: (dim_p, tk)      K-tile of W1
    # b1_ref: (1, tk)          K-tile of b1
    # w2_ref: (tk, dim_p)      K-tile of W2
    # b2_ref: (1, dim_p)       full b2
    # o_ref:  (tm, dim_p)      output tile
    # scratch: () or ((tm, dim_p) f32 accumulator,)
    x = x_ref[...]
    mxu_dtype = w2_ref.dtype

    def chunk(c):
        # One `sub`-wide slice of the hidden dim: matmul1 -> bias+GELU -> matmul2.
        lo = c * sub
        h = jnp.dot(x, w1_ref[:, lo:lo + sub],
                    preferred_element_type=jnp.float32)
        h = _gelu_exact(h + b1_ref[:, lo:lo + sub].astype(jnp.float32))
        return jnp.dot(h.astype(mxu_dtype), w2_ref[lo:lo + sub, :],
                       preferred_element_type=jnp.float32)

    if single_step:
        # Whole hidden dim in one K step: no cross-step carry, no scratch.
        acc = chunk(0)
        for c in range(1, n_sub):
            acc = acc + chunk(c)
        o_ref[...] = (acc + b2_ref[...].astype(jnp.float32)).astype(o_ref.dtype)
    else:
        acc_ref, = scratch
        k = pl.program_id(1)

        @pl.when(k == 0)
        def _():
            acc_ref[...] = jnp.zeros_like(acc_ref)

        # Unrolled sub-chunks: MXU work of chunk c overlaps GELU of chunk c+1.
        for c in range(n_sub):
            acc_ref[...] += chunk(c)

        @pl.when(k == pl.num_programs(1) - 1)
        def _():
            o_ref[...] = (acc_ref[...]
                          + b2_ref[...].astype(jnp.float32)).astype(o_ref.dtype)


def feedforward(x, w1, b1, w2, b2, *, tm=None, tk=None, mxu_dtype=None):
    """x: (..., dim). w1: (dim, inner_dim), w2: (inner_dim, dim).

    Returns an array of the same shape/dtype as x.
    mxu_dtype (e.g. jnp.bfloat16) optionally casts matmul operands for full
    MXU throughput with f32 params; accumulation stays f32.
    """
    orig_shape = x.shape
    dim = orig_shape[-1]
    inner_dim = w1.shape[1]
    assert w1.shape == (dim, inner_dim) and w2.shape == (inner_dim, dim)

    out_dtype = x.dtype
    if mxu_dtype is not None:
        x, w1, w2 = (a.astype(mxu_dtype) for a in (x, w1, w2))

    x2 = x.reshape(-1, dim)
    M = x2.shape[0]

    gen = _tpu_generation()
    hw_vmem = _vmem_capacity_bytes(gen)
    vmem_budget = hw_vmem - (8 << 20)       # headroom for compiler internals

    tm_target, tk_target = _TILE_TARGETS.get(gen, _TILE_TARGETS["unknown"])
    if tm is not None:
        tm_target = tm
    if tk is not None:
        tk_target = tk

    in_bytes = x2.dtype.itemsize
    w_bytes = w1.dtype.itemsize
    out_bytes = jnp.dtype(out_dtype).itemsize

    # Row-tile alignment: sublane packing (8 f32 / 16 bf16 / 32 int8 rows).
    row_align = max(8, 32 // max(1, in_bytes))

    dim_p = _round_up(dim, _LANE)           # lane-dense output slab
    inner_p = _round_up(inner_dim, _LANE)   # exact: no tk-multiple padding
    tk_options = _valid_tks(inner_p)

    # ---- choose tm (megacore-aware, balanced across row tiles) ------------
    if gen == "v7x" and M >= 2 * row_align:
        # >=2 row tiles so the "parallel" axis shards over both TensorCores.
        tm_target = min(tm_target, _round_up(pl.cdiv(M, 2), row_align))
    tm_c = min(_round_up(max(tm_target, row_align), row_align),
               _round_up(M, row_align))

    def balance_rows(t):
        n = pl.cdiv(M, t)
        t = _round_up(pl.cdiv(M, n), row_align)
        return t, n * t

    tm_c, M_p = balance_rows(tm_c)

    # ---- choose tk; shrink tk first, then tm, until VMEM budget fits ------
    # TODO(synk): for very large dim on v7x an extra N grid axis (tiling the
    # model dim of matmul-2 / the accumulator) would beat shrinking tm.
    tk_c = next((t for t in tk_options if t <= tk_target), tk_options[-1])
    while (_vmem_estimate(tm_c, tk_c, dim_p, in_bytes, w_bytes, out_bytes)
           > vmem_budget):
        smaller = [t for t in tk_options if t < tk_c]
        if smaller:
            tk_c = smaller[0]
        elif tm_c > row_align:
            tm_c, M_p = balance_rows(
                max(row_align, _round_up(tm_c // 2, row_align)))
        else:
            break  # minimum tiles; let the compiler do its best

    sub = 256 if tk_c % 256 == 0 else 128
    n_sub = tk_c // sub
    n_k = inner_p // tk_c
    single_step = (n_k == 1)

    # ---- zero padding (inert: GELU(0)=0, zero weight/bias slots) ----------
    if (M_p, dim_p) != (M, dim):
        x2 = jnp.pad(x2, ((0, M_p - M), (0, dim_p - dim)))
    w1p = w1 if (dim_p, inner_p) == (dim, inner_dim) else jnp.pad(
        w1, ((0, dim_p - dim), (0, inner_p - inner_dim)))
    w2p = w2 if (inner_p, dim_p) == (inner_dim, dim) else jnp.pad(
        w2, ((0, inner_p - inner_dim), (0, dim_p - dim)))
    b1p = (b1 if inner_p == inner_dim
           else jnp.pad(b1, ((0, inner_p - inner_dim),))).reshape(1, inner_p)
    b2p = (b2 if dim_p == dim
           else jnp.pad(b2, ((0, dim_p - dim),))).reshape(1, dim_p)

    grid = (M_p // tm_c, n_k)
    n_row_tiles = grid[0]

    est = _vmem_estimate(tm_c, tk_c, dim_p, in_bytes, w_bytes, out_bytes)
    # Clamp the scoped-VMEM request to physical capacity (v7x has only 64 MiB).
    vmem_limit = int(min(hw_vmem - (2 << 20), max(32 << 20, (est * 3) // 2)))

    w1_b = w1p.size * w1p.dtype.itemsize
    w2_b = w2p.size * w2p.dtype.itemsize
    b1_b = b1p.size * b1p.dtype.itemsize
    b2_b = b2p.size * b2p.dtype.itemsize
    cost = pl.CostEstimate(
        flops=4 * M_p * dim_p * inner_p,                 # two matmuls
        transcendentals=M_p * inner_p,                   # erf in GELU
        bytes_accessed=(x2.size * x2.dtype.itemsize      # x read once
                        # weights/biases are re-streamed per row tile:
                        + n_row_tiles * (w1_b + w2_b + b1_b + b2_b)
                        + M_p * dim_p * out_bytes))      # output written once

    kernel = functools.partial(_ffn_kernel, sub=sub, n_sub=n_sub,
                               single_step=single_step)
    scratch_shapes = ([] if single_step
                      else [pltpu.VMEM((tm_c, dim_p), jnp.float32)])

    out = pl.pallas_call(
        kernel,
        out_shape=jax.ShapeDtypeStruct((M_p, dim_p), out_dtype),
        grid_spec=pltpu.PrefetchScalarGridSpec(
            num_scalar_prefetch=0,
            grid=grid,
            in_specs=[
                pl.BlockSpec((tm_c, dim_p), lambda i, k: (i, 0)),   # x row tile
                pl.BlockSpec((dim_p, tk_c), lambda i, k: (0, k)),   # W1 K-tile
                pl.BlockSpec((1, tk_c), lambda i, k: (0, k)),       # b1 K-tile
                pl.BlockSpec((tk_c, dim_p), lambda i, k: (k, 0)),   # W2 K-tile
                pl.BlockSpec((1, dim_p), lambda i, k: (0, 0)),      # b2
            ],
            out_specs=pl.BlockSpec((tm_c, dim_p), lambda i, k: (i, 0)),
            scratch_shapes=scratch_shapes,
        ),
        compiler_params=pltpu.CompilerParams(
            dimension_semantics=("parallel", "arbitrary"),
            vmem_limit_bytes=vmem_limit),
        cost_estimate=cost,
    )(x2, w1p, b1p, w2p, b2p)

    return out[:M, :dim].reshape(orig_shape)


def init_params(key, dim, inner_dim, dtype=jnp.float32):
    """Deterministic synthetic params, PyTorch-Linear-like uniform init."""
    k1, k2, k3, k4 = jax.random.split(key, 4)
    bound1 = 1.0 / math.sqrt(dim)
    bound2 = 1.0 / math.sqrt(inner_dim)
    w1 = jax.random.uniform(k1, (dim, inner_dim), dtype, -bound1, bound1)
    b1 = jax.random.uniform(k2, (inner_dim,), dtype, -bound1, bound1)
    w2 = jax.random.uniform(k3, (inner_dim, dim), dtype, -bound2, bound2)
    b2 = jax.random.uniform(k4, (dim,), dtype, -bound2, bound2)
    return w1, b1, w2, b2


if __name__ == "__main__":
    batch, seq, dim, inner_dim = 2, 8, 32, 64

    key = jax.random.PRNGKey(0)
    kx, kp = jax.random.split(key)
    x = jax.random.normal(kx, (batch, seq, dim), jnp.float32)
    w1, b1, w2, b2 = init_params(kp, dim, inner_dim)

    y = feedforward(x, w1, b1, w2, b2)
    y = jax.block_until_ready(y)

    # Pure-JAX reference (same math as the PyTorch module).
    h_ref = jax.nn.gelu(x @ w1 + b1, approximate=False)
    y_ref = h_ref @ w2 + b2
    assert y.shape == x.shape and y.dtype == x.dtype
    assert jnp.allclose(y, y_ref, atol=1e-5, rtol=1e-5)

    print("KERNEL_OK")
</pallas_src>

<mosaic_0001>
module attributes {stable_mosaic.version = 11 : i64} {
  func.func @_ffn_kernel(%arg0: i32, %arg1: i32, %arg2: memref<16x128xf32, #tpu.memory_space<vmem>>, %arg3: memref<128x128xf32, #tpu.memory_space<vmem>>, %arg4: memref<1x128xf32, #tpu.memory_space<vmem>>, %arg5: memref<128x128xf32, #tpu.memory_space<vmem>>, %arg6: memref<1x128xf32, #tpu.memory_space<vmem>>, %arg7: memref<16x128xf32, #tpu.memory_space<vmem>>) attributes {dimension_semantics = [#tpu.dimension_semantics<parallel>, #tpu.dimension_semantics<arbitrary>], iteration_bounds = array<i64: 1, 1>, scalar_prefetch = 0 : i64, scratch_operands = 0 : i64, tpu.core_type = #tpu.core_type<tc>, window_params = [{transform_indices = @transform_0, window_bounds = array<i64: 16, 128>}, {transform_indices = @transform_1, window_bounds = array<i64: 128, 128>}, {transform_indices = @transform_2, window_bounds = array<i64: 1, 128>}, {transform_indices = @transform_3, window_bounds = array<i64: 128, 128>}, {pipeline_mode = #tpu.pipeline_mode<synchronous>, transform_indices = @transform_4, window_bounds = array<i64: 1, 128>}, {transform_indices = @transform_5, window_bounds = array<i64: 16, 128>}]} {
    %c0 = arith.constant 0 : index
    %c0_0 = arith.constant 0 : index
    %0 = vector.load %arg2[%c0, %c0_0] : memref<16x128xf32, #tpu.memory_space<vmem>>, vector<16x128xf32>
    %c0_1 = arith.constant 0 : index
    %c0_2 = arith.constant 0 : index
    %1 = vector.load %arg3[%c0_1, %c0_2] : memref<128x128xf32, #tpu.memory_space<vmem>>, vector<128x128xf32>
    %cst = arith.constant dense<0.000000e+00> : vector<16x128xf32>
    %2 = tpu.matmul %0, %1, %cst {dimension_numbers = #tpu.dot_dimension_numbers<[1], [0], [0], [1], [0, 0, 1, 1], [], []>} : vector<16x128xf32>, vector<128x128xf32>, vector<16x128xf32> -> vector<16x128xf32>
    %c0_3 = arith.constant 0 : index
    %c0_4 = arith.constant 0 : index
    %3 = vector.load %arg4[%c0_3, %c0_4] : memref<1x128xf32, #tpu.memory_space<vmem>>, vector<1x128xf32>
    %4 = vector.broadcast %3 : vector<1x128xf32> to vector<16x128xf32>
    %5 = arith.addf %2, %4 : vector<16x128xf32>
    %cst_5 = arith.constant 5.000000e-01 : f32
    %6 = vector.broadcast %cst_5 : f32 to vector<16x128xf32>
    %7 = arith.mulf %6, %5 : vector<16x128xf32>
    %cst_6 = arith.constant 0.707106769 : f32
    %8 = vector.broadcast %cst_6 : f32 to vector<16x128xf32>
    %9 = arith.mulf %5, %8 : vector<16x128xf32>
    %10 = math.erf %9 : vector<16x128xf32>
    %cst_7 = arith.constant 1.000000e+00 : f32
    %11 = vector.broadcast %cst_7 : f32 to vector<16x128xf32>
    %12 = arith.addf %11, %10 : vector<16x128xf32>
    %13 = arith.mulf %7, %12 : vector<16x128xf32>
    %c0_8 = arith.constant 0 : index
    %c0_9 = arith.constant 0 : index
    %14 = vector.load %arg5[%c0_8, %c0_9] : memref<128x128xf32, #tpu.memory_space<vmem>>, vector<128x128xf32>
    %cst_10 = arith.constant dense<0.000000e+00> : vector<16x128xf32>
    %15 = tpu.matmul %13, %14, %cst_10 {dimension_numbers = #tpu.dot_dimension_numbers<[1], [0], [0], [1], [0, 0, 1, 1], [], []>} : vector<16x128xf32>, vector<128x128xf32>, vector<16x128xf32> -> vector<16x128xf32>
    %c0_11 = arith.constant 0 : index
    %c0_12 = arith.constant 0 : index
    %16 = vector.load %arg6[%c0_11, %c0_12] : memref<1x128xf32, #tpu.memory_space<vmem>>, vector<1x128xf32>
    %17 = vector.broadcast %16 : vector<1x128xf32> to vector<16x128xf32>
    %18 = arith.addf %15, %17 : vector<16x128xf32>
    %c0_13 = arith.constant 0 : index
    %c0_14 = arith.constant 0 : index
    %19 = vector.load %arg7[%c0_13, %c0_14] : memref<16x128xf32, #tpu.memory_space<vmem>>, vector<16x128xf32>
    tpu.vector_store %arg7[%c0_13, %c0_14], %18 {strides = array<i32>} : memref<16x128xf32, #tpu.memory_space<vmem>>, vector<16x128xf32>,
    return
  }
  func.func @transform_0(%arg0: i32, %arg1: i32) -> (i32, i32) {
    %c0_i32 = arith.constant 0 : i32
    %c0_i32_0 = arith.constant 0 : i32
    return %arg0, %c0_i32 : i32, i32
  }
  func.func @transform_1(%arg0: i32, %arg1: i32) -> (i32, i32) {
    %c0_i32 = arith.constant 0 : i32
    %c0_i32_0 = arith.constant 0 : i32
    return %c0_i32, %arg1 : i32, i32
  }
  func.func @transform_2(%arg0: i32, %arg1: i32) -> (i32, i32) {
    %c0_i32 = arith.constant 0 : i32
    %c0_i32_0 = arith.constant 0 : i32
    return %c0_i32, %arg1 : i32, i32
  }
  func.func @transform_3(%arg0: i32, %arg1: i32) -> (i32, i32) {
    %c0_i32 = arith.constant 0 : i32
    %c0_i32_0 = arith.constant 0 : i32
    return %arg1, %c0_i32 : i32, i32
  }
  func.func @transform_4(%arg0: i32, %arg1: i32) -> (i32, i32) {
    %c0_i32 = arith.constant 0 : i32
    %c0_i32_0 = arith.constant 0 : i32
    %c0_i32_1 = arith.constant 0 : i32
    return %c0_i32, %c0_i32_0 : i32, i32
  }
  func.func @transform_5(%arg0: i32, %arg1: i32) -> (i32, i32) {
    %c0_i32 = arith.constant 0 : i32
    %c0_i32_0 = arith.constant 0 : i32
    return %arg0, %c0_i32 : i32, i32
  }
}

</mosaic_0001>

<llo_original>
// kernel: tpu_custom_call.1
$region0: #{tpu_custom_call.1}
  #allocation0 [shape = 'u32[]', space=smem, size = 0x4, offset = 0x4, fixed_abs, tag = 'smem constant byte address 0x4 - core index']
  #allocation1 [shape = 'u32[144,128]{1,0:T(1,128)}', space=vmem, size = 0x12000, scoped, tag = 'internal scratch']
  %s0 = inlined_call_operand.hbm [shape: f32[16,128], index: 0, kind: input, shape index: {}]
  %s1 = inlined_call_operand.hbm [shape: f32[128,128], index: 1, kind: input, shape index: {}]
  %s2 = inlined_call_operand.vmem [shape: f32[1,128], index: 2, kind: input, shape index: {}]
  %s3 = inlined_call_operand.hbm [shape: f32[128,128], index: 3, kind: input, shape index: {}]
  %s4 = inlined_call_operand.vmem [shape: f32[1,128], index: 4, kind: input, shape index: {}]
  %s5 = inlined_call_operand.hbm [shape: f32[16,128], index: 5, kind: output, shape index: {}]
  %s6 = sld [smem:[#allocation0]]
  $region42: #{tpu_custom_call.1} parent=0
    _
  %s8 = ssub.s32 1, %s6
  %s9 = scalar_select 0, %s8, %s6
  $region1: #{tpu_custom_call.1} parent=0
    #allocation2 [shape = 'u8[8192]{0}', space=vmem, size = 0x2000, scoped, tag = 'input window, operand 0, single buffered']
    #allocation3 [shape = 's32[1]{0}', space=sflag, size = 0x4, scoped, tag = 'scoped memory for tpu_custom_call.1']
    #allocation4 [shape = 's32[1]{0}', space=sflag, size = 0x4, scoped, tag = 'scoped memory for tpu_custom_call.1']
    #allocation5 [shape = 'u8[65536]{0}', space=vmem, size = 0x10000, scoped, tag = 'input window, operand 1, single buffered']
    #allocation6 [shape = 's32[1]{0}', space=sflag, size = 0x4, scoped, tag = 'scoped memory for tpu_custom_call.1']
    #allocation7 [shape = 'u8[65536]{0}', space=vmem, size = 0x10000, scoped, tag = 'input window, operand 3, single buffered']
    #allocation8 [shape = 'u8[8192]{0}', space=vmem, size = 0x2000, scoped, tag = 'output window, operand 0, single buffered']
    %10 = vsyncpa [#allocation3], 0
    %11 = vsyncpa [#allocation6], 0
    %12 = vsyncpa [#allocation4], 0
    // Predicated region
    $region2: #{tpu_custom_call.1} parent=1 // pred_check
      _
    $region3: #{tpu_custom_call.1} parent=1 // pred_check_branch
      %14 = sbr.rel (0) target = $region5
    $region4: #{tpu_custom_call.1} parent=1 // pred_region
      %s16 = ssub.s32 256, 256
      %17 = vsyncadd [#allocation3], %s16
      %s18 = sshll.u32 [#allocation2], 4
      %s19 = int_to_ptr.vmem [resolvable:$true] %s18
      %24 = dma.hbm_to_vmem [thread:$0]  %s0, 256, %s19, [#allocation3], 128, 128, 8
    $region5: #{tpu_custom_call.1} parent=1 // pred_fallthru
      _
    // Predicated region
    $region6: #{tpu_custom_call.1} parent=1 // pred_check
      _
    $region7: #{tpu_custom_call.1} parent=1 // pred_check_branch
      %26 = sbr.rel (0) target = $region9
    $region8: #{tpu_custom_call.1} parent=1 // pred_region
      %s28 = ssub.s32 2048, 2048
      %29 = vsyncadd [#allocation6], %s28
      %s30 = sshll.u32 [#allocation5], 4
      %s31 = int_to_ptr.vmem [resolvable:$true] %s30
      %36 = dma.hbm_to_vmem [thread:$0]  %s1, 2048, %s31, [#allocation6], 128, 128, 8
    $region9: #{tpu_custom_call.1} parent=1 // pred_fallthru
      _
    // Predicated region
    $region10: #{tpu_custom_call.1} parent=1 // pred_check
      _
    $region11: #{tpu_custom_call.1} parent=1 // pred_check_branch
      %38 = sbr.rel (0) target = $region13
    $region12: #{tpu_custom_call.1} parent=1 // pred_region
      _
    $region13: #{tpu_custom_call.1} parent=1 // pred_fallthru
      _
    // Predicated region
    $region14: #{tpu_custom_call.1} parent=1 // pred_check
      _
    $region15: #{tpu_custom_call.1} parent=1 // pred_check_branch
      %40 = sbr.rel (0) target = $region17
    $region16: #{tpu_custom_call.1} parent=1 // pred_region
      %s42 = ssub.s32 2048, 2048
      %43 = vsyncadd [#allocation6], %s42
      %s44 = sshll.u32 [#allocation7], 4
      %s45 = int_to_ptr.vmem [resolvable:$true] %s44
      %50 = dma.hbm_to_vmem [thread:$0]  %s3, 2048, %s45, [#allocation6], 128, 128, 8
    $region17: #{tpu_custom_call.1} parent=1 // pred_fallthru
      _
    // Predicated region
    $region18: #{tpu_custom_call.1} parent=1 // pred_check
      _
    $region19: #{tpu_custom_call.1} parent=1 // pred_check_branch
      %52 = sbr.rel (0) target = $region21
    $region20: #{tpu_custom_call.1} parent=1 // pred_region
      _
    $region21: #{tpu_custom_call.1} parent=1 // pred_fallthru
      _
    // Predicated region
    $region22: #{tpu_custom_call.1} parent=1 // pred_check
      _
    $region23: #{tpu_custom_call.1} parent=1 // pred_check_branch
      %54 = sbr.rel (0) target = $region25
    $region24: #{tpu_custom_call.1} parent=1 // pred_region
      %55 = dma.done [#allocation3], 256
    $region25: #{tpu_custom_call.1} parent=1 // pred_fallthru
      _
    // Predicated region
    $region26: #{tpu_custom_call.1} parent=1 // pred_check
      _
    $region27: #{tpu_custom_call.1} parent=1 // pred_check_branch
      %57 = sbr.rel (0) target = $region29
    $region28: #{tpu_custom_call.1} parent=1 // pred_region
      %58 = dma.done [#allocation6], 2048
    $region29: #{tpu_custom_call.1} parent=1 // pred_fallthru
      _
    // Predicated region
    $region30: #{tpu_custom_call.1} parent=1 // pred_check
      _
    $region31: #{tpu_custom_call.1} parent=1 // pred_check_branch
      %60 = sbr.rel (0) target = $region33
    $region32: #{tpu_custom_call.1} parent=1 // pred_region
      %61 = dma.done [#allocation6], 2048
    $region33: #{tpu_custom_call.1} parent=1 // pred_fallthru
      _
    %v62 = vld [vmem:[#allocation2] sm:$0xff]
    %v63 = vld [vmem:[#allocation2 + $0x8] sm:$0xff]
    %v64 = vld [vmem:[#allocation5] sm:$0xff]
    %v65 = vld [vmem:[#allocation5 + $0x8] sm:$0xff]
    %v66 = vld [vmem:[#allocation5 + $0x10] sm:$0xff]
    %v67 = vld [vmem:[#allocation5 + $0x18] sm:$0xff]
    %v68 = vld [vmem:[#allocation5 + $0x20] sm:$0xff]
    %v69 = vld [vmem:[#allocation5 + $0x28] sm:$0xff]
    %v70 = vld [vmem:[#allocation5 + $0x30] sm:$0xff]
    %v71 = vld [vmem:[#allocation5 + $0x38] sm:$0xff]
    %v72 = vld [vmem:[#allocation5 + $0x40] sm:$0xff]
    %v73 = vld [vmem:[#allocation5 + $0x48] sm:$0xff]
    %v74 = vld [vmem:[#allocation5 + $0x50] sm:$0xff]
    %v75 = vld [vmem:[#allocation5 + $0x58] sm:$0xff]
    %v76 = vld [vmem:[#allocation5 + $0x60] sm:$0xff]
    %v77 = vld [vmem:[#allocation5 + $0x68] sm:$0xff]
    %v78 = vld [vmem:[#allocation5 + $0x70] sm:$0xff]
    %v79 = vld [vmem:[#allocation5 + $0x78] sm:$0xff]
    %v80 = vld [vmem:[%s2] sm:$0x1]
    %v82 = vlaneseq
    %v83 = vshrl.u32 %v82, 7
    %v84 = vsub.s32 0, %v83
    %v85 = vrot.slane %v80, %v84
    %87 = vmatprep.subr.mxu0 0.0
    %88 = vmatpush1.msra.mxu0 %v79
    %89 = vmatprep.subr.mxu0 0.0
    %90 = vmatpush1.msra.mxu0 %v78
    %91 = vmatprep.subr.mxu0 0.0
    %92 = vmatpush1.msra.mxu0 %v77
    %93 = vmatprep.subr.mxu0 0.0
    %94 = vmatpush1.msra.mxu0 %v76
    %95 = vmatprep.subr.mxu0 0.0
    %96 = vmatpush1.msra.mxu0 %v75
    %97 = vmatprep.subr.mxu0 0.0
    %98 = vmatpush1.msra.mxu0 %v74
    %99 = vmatprep.subr.mxu0 0.0
    %100 = vmatpush1.msra.mxu0 %v73
    %101 = vmatprep.subr.mxu0 0.0
    %102 = vmatpush1.msra.mxu0 %v72
    %103 = vmatprep.subr.mxu0 0.0
    %104 = vmatpush1.msra.mxu0 %v71
    %105 = vmatprep.subr.mxu0 0.0
    %106 = vmatpush1.msra.mxu0 %v70
    %107 = vmatprep.subr.mxu0 0.0
    %108 = vmatpush1.msra.mxu0 %v69
    %109 = vmatprep.subr.mxu0 0.0
    %110 = vmatpush1.msra.mxu0 %v68
    %111 = vmatprep.subr.mxu0 0.0
    %112 = vmatpush1.msra.mxu0 %v67
    %113 = vmatprep.subr.mxu0 0.0
    %114 = vmatpush1.msra.mxu0 %v66
    %115 = vmatprep.subr.mxu0 0.0
    %116 = vmatpush1.msra.mxu0 %v65
    %117 = vmatprep.subr.mxu0 0.0
    %118 = vmatpush1.msra.mxu0 %v64
    %119 = vmatprep.subr.mxu0 0.0
    %120 = vmatpush2.msra.mxu0 0.0
    %121 = vmatprep.subr.mxu0 0.0
    %122 = vmatpush2.msra.mxu0 0.0
    %123 = vmatprep.subr.mxu0 0.0
    %124 = vmatpush2.msra.mxu0 0.0
    %125 = vmatprep.subr.mxu0 0.0
    %126 = vmatpush2.msra.mxu0 0.0
    %127 = vmatprep.subr.mxu0 0.0
    %128 = vmatpush2.msra.mxu0 0.0
    %129 = vmatprep.subr.mxu0 0.0
    %130 = vmatpush2.msra.mxu0 0.0
    %131 = vmatprep.subr.mxu0 0.0
    %132 = vmatpush2.msra.mxu0 0.0
    %133 = vmatprep.subr.mxu0 0.0
    %134 = vmatpush2.msra.mxu0 0.0
    %135 = vmatprep.subr.mxu0 0.0
    %136 = vmatpush2.msra.mxu0 0.0
    %137 = vmatprep.subr.mxu0 0.0
    %138 = vmatpush2.msra.mxu0 0.0
    %139 = vmatprep.subr.mxu0 0.0
    %140 = vmatpush2.msra.mxu0 0.0
    %141 = vmatprep.subr.mxu0 0.0
    %142 = vmatpush2.msra.mxu0 0.0
    %143 = vmatprep.subr.mxu0 0.0
    %144 = vmatpush2.msra.mxu0 0.0
    %145 = vmatprep.subr.mxu0 0.0
    %146 = vmatpush2.msra.mxu0 0.0
    %147 = vmatprep.subr.mxu0 0.0
    %148 = vmatpush2.msra.mxu0 0.0
    %149 = vmatprep.subr.mxu0 0.0
    %150 = vmatpush2.msra.mxu0 0.0
    %151 = vmatprep.mubr.f32.mxu0 0.0
    %152 = vmatmul.mubr.f32.gmra.mxu0 %v62
    %v153 = vpop.f32.mrf.mxu0
    %v154 = vadd.f32 %v85, %v153
    %v155 = vpop.f32.mrf.mxu0
    %156 = vmatprep.mubr.f32.mxu0 0.0
    %157 = vmatmul.mubr.f32.gmra.mxu0 %v63
    %v158 = vpop.f32.mrf.mxu0
    %v159 = vadd.f32 %v85, %v158
    %v160 = vpop.f32.mrf.mxu0
    %161 = vdwg.mxu0
    %v162 = vmul.f32 %v154, 0.5
    %v163 = vmul.f32 %v159, 0.5
    %v164 = vmul.f32 %v154, 0.70710677
    %v165 = vmul.f32 %v159, 0.70710677
    %v166 = verf.f32.pop %v164
    %v167 = verf.f32.pop %v165
    %v168 = vadd.f32 %v166, 1.0
    %v169 = vadd.f32 %v167, 1.0
    %v170 = vmul.f32 %v162, %v168
    %v171 = vmul.f32 %v163, %v169
    %v172 = vld [vmem:[#allocation7] sm:$0xff]
    %v173 = vld [vmem:[#allocation7 + $0x8] sm:$0xff]
    %v174 = vld [vmem:[#allocation7 + $0x10] sm:$0xff]
    %v175 = vld [vmem:[#allocation7 + $0x18] sm:$0xff]
    %v176 = vld [vmem:[#allocation7 + $0x20] sm:$0xff]
    %v177 = vld [vmem:[#allocation7 + $0x28] sm:$0xff]
    %v178 = vld [vmem:[#allocation7 + $0x30] sm:$0xff]
    %v179 = vld [vmem:[#allocation7 + $0x38] sm:$0xff]
    %v180 = vld [vmem:[#allocation7 + $0x40] sm:$0xff]
    %v181 = vld [vmem:[#allocation7 + $0x48] sm:$0xff]
    %v182 = vld [vmem:[#allocation7 + $0x50] sm:$0xff]
    %v183 = vld [vmem:[#allocation7 + $0x58] sm:$0xff]
    %v184 = vld [vmem:[#allocation7 + $0x60] sm:$0xff]
    %v185 = vld [vmem:[#allocation7 + $0x68] sm:$0xff]
    %v186 = vld [vmem:[#allocation7 + $0x70] sm:$0xff]
    %v187 = vld [vmem:[#allocation7 + $0x78] sm:$0xff]
    %v188 = vld [vmem:[%s4] sm:$0x1]
    %v190 = vlaneseq
    %v191 = vshrl.u32 %v190, 7
    %v192 = vsub.s32 0, %v191
    %v193 = vrot.slane %v188, %v192
    %195 = vmatprep.subr.mxu0 0.0
    %196 = vmatpush1.msra.mxu0 %v187
    %197 = vmatprep.subr.mxu0 0.0
    %198 = vmatpush1.msra.mxu0 %v186
    %199 = vmatprep.subr.mxu0 0.0
    %200 = vmatpush1.msra.mxu0 %v185
    %201 = vmatprep.subr.mxu0 0.0
    %202 = vmatpush1.msra.mxu0 %v184
    %203 = vmatprep.subr.mxu0 0.0
    %204 = vmatpush1.msra.mxu0 %v183
    %205 = vmatprep.subr.mxu0 0.0
    %206 = vmatpush1.msra.mxu0 %v182
    %207 = vmatprep.subr.mxu0 0.0
    %208 = vmatpush1.msra.mxu0 %v181
    %209 = vmatprep.subr.mxu0 0.0
    %210 = vmatpush1.msra.mxu0 %v180
    %211 = vmatprep.subr.mxu0 0.0
    %212 = vmatpush1.msra.mxu0 %v179
    %213 = vmatprep.subr.mxu0 0.0
    %214 = vmatpush1.msra.mxu0 %v178
    %215 = vmatprep.subr.mxu0 0.0
    %216 = vmatpush1.msra.mxu0 %v177
    %217 = vmatprep.subr.mxu0 0.0
    %218 = vmatpush1.msra.mxu0 %v176
    %219 = vmatprep.subr.mxu0 0.0
    %220 = vmatpush1.msra.mxu0 %v175
    %221 = vmatprep.subr.mxu0 0.0
    %222 = vmatpush1.msra.mxu0 %v174
    %223 = vmatprep.subr.mxu0 0.0
    %224 = vmatpush1.msra.mxu0 %v173
    %225 = vmatprep.subr.mxu0 0.0
    %226 = vmatpush1.msra.mxu0 %v172
    %227 = vmatprep.subr.mxu0 0.0
    %228 = vmatpush2.msra.mxu0 0.0
    %229 = vmatprep.subr.mxu0 0.0
    %230 = vmatpush2.msra.mxu0 0.0
    %231 = vmatprep.subr.mxu0 0.0
    %232 = vmatpush2.msra.mxu0 0.0
    %233 = vmatprep.subr.mxu0 0.0
    %234 = vmatpush2.msra.mxu0 0.0
    %235 = vmatprep.subr.mxu0 0.0
    %236 = vmatpush2.msra.mxu0 0.0
    %237 = vmatprep.subr.mxu0 0.0
    %238 = vmatpush2.msra.mxu0 0.0
    %239 = vmatprep.subr.mxu0 0.0
    %240 = vmatpush2.msra.mxu0 0.0
    %241 = vmatprep.subr.mxu0 0.0
    %242 = vmatpush2.msra.mxu0 0.0
    %243 = vmatprep.subr.mxu0 0.0
    %244 = vmatpush2.msra.mxu0 0.0
    %245 = vmatprep.subr.mxu0 0.0
    %246 = vmatpush2.msra.mxu0 0.0
    %247 = vmatprep.subr.mxu0 0.0
    %248 = vmatpush2.msra.mxu0 0.0
    %249 = vmatprep.subr.mxu0 0.0
    %250 = vmatpush2.msra.mxu0 0.0
    %251 = vmatprep.subr.mxu0 0.0
    %252 = vmatpush2.msra.mxu0 0.0
    %253 = vmatprep.subr.mxu0 0.0
    %254 = vmatpush2.msra.mxu0 0.0
    %255 = vmatprep.subr.mxu0 0.0
    %256 = vmatpush2.msra.mxu0 0.0
    %257 = vmatprep.subr.mxu0 0.0
    %258 = vmatpush2.msra.mxu0 0.0
    %259 = vmatprep.mubr.f32.mxu0 0.0
    %260 = vmatmul.mubr.f32.gmra.mxu0 %v170
    %v261 = vpop.f32.mrf.mxu0
    %v262 = vadd.f32 %v193, %v261
    %v263 = vpop.f32.mrf.mxu0
    %264 = vmatprep.mubr.f32.mxu0 0.0
    %265 = vmatmul.mubr.f32.gmra.mxu0 %v171
    %v266 = vpop.f32.mrf.mxu0
    %v267 = vadd.f32 %v193, %v266
    %v268 = vpop.f32.mrf.mxu0
    %269 = vdwg.mxu0
    %270 = vst [vmem:[#allocation8] sm:$0xff] %v262
    %271 = vst [vmem:[#allocation8 + $0x8] sm:$0xff] %v267
    // Predicated region
    $region34: #{tpu_custom_call.1} parent=1 // pred_check
      _
    $region35: #{tpu_custom_call.1} parent=1 // pred_check_branch
      %273 = sbr.rel (0) target = $region37
    $region36: #{tpu_custom_call.1} parent=1 // pred_region
      %s275 = ssub.s32 256, 256
      %276 = vsyncadd [#allocation4], %s275
      %s277 = sshll.u32 [#allocation8], 4
      %s278 = int_to_ptr.vmem [resolvable:$true] %s277
      %283 = dma.vmem_to_hbm [thread:$0]  %s278, 256, %s5, [#allocation4], 128, 128, 8
    $region37: #{tpu_custom_call.1} parent=1 // pred_fallthru
      _
    // Predicated region
    $region38: #{tpu_custom_call.1} parent=1 // pred_check
      _
    $region39: #{tpu_custom_call.1} parent=1 // pred_check_branch
      %285 = sbr.rel (0) target = $region41
    $region40: #{tpu_custom_call.1} parent=1 // pred_region
      %286 = dma.done [#allocation4], 256
    $region41: #{tpu_custom_call.1} parent=1 // pred_fallthru
      _
    %287 = vsyncpa [#allocation3], 1
    %288 = vsyncpa [#allocation6], 1
    %289 = vsyncpa [#allocation4], 1

</llo_original>
